<compile_context>
chip_gen: v6e
topology: v6e:2x2x1
jax: 0.10.0
libtpu: 0.0.40
codegen_flags: <defaults>
</compile_context>

<pallas_src>
import jax
import jax.numpy as jnp
from jax.experimental import pallas as pl
from jax.experimental.pallas import tpu as pltpu

DEPPATH_DIM = 7
EMBEDDING_DIM = 100
IN_DIM = DEPPATH_DIM * EMBEDDING_DIM   # 700
OUT_PAD = 768                          # 6 * 128: lane-dense padded decoder width
H_DIM = 40
LATENT_DIM = 16


def _round_up(n, m):
    return ((n + m - 1) // m) * m


def _pick_tb(b8, block_rows):
    # Aim for >=4 grid steps (DMA/compute pipelining + both v7x TCs), with
    # >=128 rows/step (per-step overhead ~0.35us), capped by block_rows (VMEM)
    # and by the batch itself.
    target = max(128, _round_up(pl.cdiv(b8, 4), 8))
    return max(8, min(b8, block_rows, target))


def _vae_kernel(x_ref, eps_ref,
                w1_ref, b1_ref,
                w2_ref, b2_ref,
                w3_ref, b3_ref,
                w4_ref, b4_ref,
                out_ref, mlv_ref):
    # ----- encoder -----  (bf16 operands on the MXU, f32 accumulation)
    x_bf = x_ref[...].astype(jnp.bfloat16)            # cast in-kernel, not in wrapper
    h = jnp.dot(x_bf, w1_ref[...],
                preferred_element_type=jnp.float32) + b1_ref[...]
    h = jnp.where(h >= 0.0, h, 0.2 * h)                # LeakyReLU(0.2)

    # Fused mean/log_var head: one (40, 32) matmul instead of two (40, 16).
    hv = jnp.dot(h.astype(jnp.bfloat16), w2_ref[...],
                 preferred_element_type=jnp.float32) + b2_ref[...]
    mean = hv[:, :LATENT_DIM]
    log_var = hv[:, LATENT_DIM:]

    # ----- reparameterize -----
    z = mean + eps_ref[...] * jnp.exp(log_var * 0.5)   # (TB, 16), f32

    # ----- decoder -----  (output axis lane-padded to 768; cols 700:768 are junk)
    d = jnp.dot(z.astype(jnp.bfloat16), w3_ref[...],
                preferred_element_type=jnp.float32) + b3_ref[...]
    d = jnp.maximum(d, 0.0)                            # ReLU
    o = jnp.dot(d.astype(jnp.bfloat16), w4_ref[...],
                preferred_element_type=jnp.float32) + b4_ref[...]

    # sigmoid(x) == 0.5 * tanh(x / 2) + 0.5 : one EUP transcendental, VALU mul/add.
    out_ref[...] = (0.5 * jnp.tanh(0.5 * o) + 0.5).astype(out_ref.dtype)
    mlv_ref[...] = hv                                  # [mean | log_var], f32


def prepare_params(params):
    """One-time prep: cast weights to bf16, lane-pad the decoder head 700 -> 768."""
    pad = OUT_PAD - IN_DIM
    w4 = jnp.pad(params["w4"], ((0, 0), (0, pad)))
    b4 = jnp.pad(params["b4"], ((0, 0), (0, pad)))
    bf = lambda a: a.astype(jnp.bfloat16)
    f32 = lambda a: a.astype(jnp.float32)
    return dict(w1=bf(params["w1"]), b1=f32(params["b1"]),
                w2=bf(params["w2"]), b2=f32(params["b2"]),
                w3=bf(params["w3"]), b3=f32(params["b3"]),
                w4=bf(w4), b4=f32(b4))


def vae_forward(x, eps, prepped, *, block_rows=1024):
    """x: (B, 700), eps: (B, 16), prepped = prepare_params(params).

    Returns (out (B,700) bf16, mean (B,16) f32, log_var (B,16) f32)."""
    B = x.shape[0]
    x32 = x.astype(jnp.float32)        # native f32 in; kernel casts to bf16 itself
    eps32 = eps.astype(jnp.float32)

    B8 = _round_up(B, 8)               # pad batch only to the sublane multiple
    if B8 != B:
        x32 = jnp.pad(x32, ((0, B8 - B), (0, 0)))
        eps32 = jnp.pad(eps32, ((0, B8 - B), (0, 0)))

    TB = _pick_tb(B8, block_rows)
    grid = (pl.cdiv(B8, TB),)          # partial last tile handled by masked stores

    args = (x32, eps32,
            prepped["w1"], prepped["b1"], prepped["w2"], prepped["b2"],
            prepped["w3"], prepped["b3"], prepped["w4"], prepped["b4"])

    batch_spec = lambda feat: pl.BlockSpec((TB, feat), lambda i: (i, 0))
    resident = lambda a: pl.BlockSpec(a.shape, lambda i: (0, 0))  # VMEM-resident

    in_specs = [batch_spec(IN_DIM), batch_spec(LATENT_DIM)] + \
               [resident(a) for a in args[2:]]
    out_specs = (batch_spec(OUT_PAD), batch_spec(2 * LATENT_DIM))
    out_shapes = (jax.ShapeDtypeStruct((B8, OUT_PAD), jnp.bfloat16),
                  jax.ShapeDtypeStruct((B8, 2 * LATENT_DIM), jnp.float32))

    out, mlv = pl.pallas_call(
        _vae_kernel,
        grid=grid,
        out_shape=out_shapes,
        in_specs=in_specs,
        out_specs=out_specs,
        compiler_params=pltpu.CompilerParams(
            dimension_semantics=("parallel",),        # shard batch tiles across TCs
            vmem_limit_bytes=32 * 1024 * 1024),       # v5e default is 16 MiB
    )(*args)

    # TODO(synk): in a fused pipeline, defer these slices to the consumer.
    out = out[:B, :IN_DIM]
    mean = mlv[:B, :LATENT_DIM]
    log_var = mlv[:B, LATENT_DIM:]
    return out, mean, log_var


def init_params(key):
    """Deterministic PyTorch-style Linear init: U(-1/sqrt(fan_in), 1/sqrt(fan_in))."""
    ks = jax.random.split(key, 8)

    def linear(kw, kb, fan_in, fan_out):
        bound = 1.0 / jnp.sqrt(fan_in)
        w = jax.random.uniform(kw, (fan_in, fan_out), jnp.float32, -bound, bound)
        b = jax.random.uniform(kb, (1, fan_out), jnp.float32, -bound, bound)
        return w, b

    w1, b1 = linear(ks[0], ks[1], IN_DIM, H_DIM)
    w2, b2 = linear(ks[2], ks[3], H_DIM, 2 * LATENT_DIM)   # fused mean/log_var head
    w3, b3 = linear(ks[4], ks[5], LATENT_DIM, H_DIM)
    w4, b4 = linear(ks[6], ks[7], H_DIM, IN_DIM)
    return dict(w1=w1, b1=b1, w2=w2, b2=b2, w3=w3, b3=b3, w4=w4, b4=b4)


if __name__ == "__main__":
    key = jax.random.PRNGKey(0)
    k_param, k_x, k_eps = jax.random.split(key, 3)

    B = 8
    params = init_params(k_param)
    prepped = prepare_params(params)
    x = jax.random.normal(k_x, (B, IN_DIM), jnp.float32)
    eps = jax.random.normal(k_eps, (B, LATENT_DIM), jnp.float32)  # Variable(torch.randn(...))

    out, mean, log_var = vae_forward(x, eps, prepped)
    jax.block_until_ready((out, mean, log_var))

    # pure-JAX f32 reference (kernel uses bf16 matmuls + bf16 output -> loose tol)
    h = x @ params["w1"] + params["b1"]
    h = jnp.where(h >= 0, h, 0.2 * h)
    hv = h @ params["w2"] + params["b2"]
    m_ref, lv_ref = hv[:, :LATENT_DIM], hv[:, LATENT_DIM:]
    z = m_ref + eps * jnp.exp(lv_ref / 2)
    d = jnp.maximum(z @ params["w3"] + params["b3"], 0.0)
    o_ref = jax.nn.sigmoid(d @ params["w4"] + params["b4"])

    assert out.shape == (B, IN_DIM) and out.dtype == jnp.bfloat16
    assert jnp.allclose(out.astype(jnp.float32), o_ref, atol=2e-2), "decoder output mismatch"
    assert jnp.allclose(mean, m_ref, atol=2e-2), "mean mismatch"
    assert jnp.allclose(log_var, lv_ref, atol=2e-2), "log_var mismatch"

    print("KERNEL_OK")
</pallas_src>

<mosaic_0001>
module attributes {stable_mosaic.version = 11 : i64} {
  func.func @_vae_kernel(%arg0: i32, %arg1: memref<8x700xf32, #tpu.memory_space<vmem>>, %arg2: memref<8x16xf32, #tpu.memory_space<vmem>>, %arg3: memref<700x40xbf16, #tpu.memory_space<vmem>>, %arg4: memref<1x40xf32, #tpu.memory_space<vmem>>, %arg5: memref<40x32xbf16, #tpu.memory_space<vmem>>, %arg6: memref<1x32xf32, #tpu.memory_space<vmem>>, %arg7: memref<16x40xbf16, #tpu.memory_space<vmem>>, %arg8: memref<1x40xf32, #tpu.memory_space<vmem>>, %arg9: memref<40x768xbf16, #tpu.memory_space<vmem>>, %arg10: memref<1x768xf32, #tpu.memory_space<vmem>>, %arg11: memref<8x768xbf16, #tpu.memory_space<vmem>>, %arg12: memref<8x32xf32, #tpu.memory_space<vmem>>) attributes {dimension_semantics = [#tpu.dimension_semantics<parallel>], iteration_bounds = array<i64: 1>, scalar_prefetch = 0 : i64, scratch_operands = 0 : i64, tpu.core_type = #tpu.core_type<tc>, window_params = [{transform_indices = @transform_0, window_bounds = array<i64: 8, 700>}, {transform_indices = @transform_1, window_bounds = array<i64: 8, 16>}, {pipeline_mode = #tpu.pipeline_mode<synchronous>, transform_indices = @transform_2, window_bounds = array<i64: 700, 40>}, {pipeline_mode = #tpu.pipeline_mode<synchronous>, transform_indices = @transform_3, window_bounds = array<i64: 1, 40>}, {pipeline_mode = #tpu.pipeline_mode<synchronous>, transform_indices = @transform_4, window_bounds = array<i64: 40, 32>}, {pipeline_mode = #tpu.pipeline_mode<synchronous>, transform_indices = @transform_5, window_bounds = array<i64: 1, 32>}, {pipeline_mode = #tpu.pipeline_mode<synchronous>, transform_indices = @transform_6, window_bounds = array<i64: 16, 40>}, {pipeline_mode = #tpu.pipeline_mode<synchronous>, transform_indices = @transform_7, window_bounds = array<i64: 1, 40>}, {pipeline_mode = #tpu.pipeline_mode<synchronous>, transform_indices = @transform_8, window_bounds = array<i64: 40, 768>}, {pipeline_mode = #tpu.pipeline_mode<synchronous>, transform_indices = @transform_9, window_bounds = array<i64: 1, 768>}, {transform_indices = @transform_10, window_bounds = array<i64: 8, 768>}, {transform_indices = @transform_11, window_bounds = array<i64: 8, 32>}]} {
    %c0 = arith.constant 0 : index
    %c0_0 = arith.constant 0 : index
    %0 = vector.load %arg1[%c0, %c0_0] : memref<8x700xf32, #tpu.memory_space<vmem>>, vector<8x700xf32>
    %1 = arith.truncf %0 : vector<8x700xf32> to vector<8x700xbf16>
    %c0_1 = arith.constant 0 : index
    %c0_2 = arith.constant 0 : index
    %2 = vector.load %arg3[%c0_1, %c0_2] : memref<700x40xbf16, #tpu.memory_space<vmem>>, vector<700x40xbf16>
    %cst = arith.constant dense<0.000000e+00> : vector<8x40xf32>
    %3 = tpu.matmul %1, %2, %cst {dimension_numbers = #tpu.dot_dimension_numbers<[1], [0], [0], [1], [0, 0, 1, 1], [], []>} : vector<8x700xbf16>, vector<700x40xbf16>, vector<8x40xf32> -> vector<8x40xf32>
    %c0_3 = arith.constant 0 : index
    %c0_4 = arith.constant 0 : index
    %4 = vector.load %arg4[%c0_3, %c0_4] : memref<1x40xf32, #tpu.memory_space<vmem>>, vector<1x40xf32>
    %5 = vector.broadcast %4 : vector<1x40xf32> to vector<8x40xf32>
    %6 = arith.addf %3, %5 : vector<8x40xf32>
    %cst_5 = arith.constant 0.000000e+00 : f32
    %7 = vector.broadcast %cst_5 : f32 to vector<8x40xf32>
    %8 = arith.cmpf oge, %6, %7 : vector<8x40xf32>
    %cst_6 = arith.constant 2.000000e-01 : f32
    %9 = vector.broadcast %cst_6 : f32 to vector<8x40xf32>
    %10 = arith.mulf %9, %6 : vector<8x40xf32>
    %11 = arith.select %8, %6, %10 : vector<8x40xi1>, vector<8x40xf32>
    %12 = arith.truncf %11 : vector<8x40xf32> to vector<8x40xbf16>
    %c0_7 = arith.constant 0 : index
    %c0_8 = arith.constant 0 : index
    %13 = vector.load %arg5[%c0_7, %c0_8] : memref<40x32xbf16, #tpu.memory_space<vmem>>, vector<40x32xbf16>
    %cst_9 = arith.constant dense<0.000000e+00> : vector<8x32xf32>
    %14 = tpu.matmul %12, %13, %cst_9 {dimension_numbers = #tpu.dot_dimension_numbers<[1], [0], [0], [1], [0, 0, 1, 1], [], []>} : vector<8x40xbf16>, vector<40x32xbf16>, vector<8x32xf32> -> vector<8x32xf32>
    %c0_10 = arith.constant 0 : index
    %c0_11 = arith.constant 0 : index
    %15 = vector.load %arg6[%c0_10, %c0_11] : memref<1x32xf32, #tpu.memory_space<vmem>>, vector<1x32xf32>
    %16 = vector.broadcast %15 : vector<1x32xf32> to vector<8x32xf32>
    %17 = arith.addf %14, %16 : vector<8x32xf32>
    %18 = vector.extract_strided_slice %17 {offsets = [0, 0], sizes = [8, 16], strides = [1, 1]} : vector<8x32xf32> to vector<8x16xf32>
    %19 = vector.extract_strided_slice %17 {offsets = [0, 16], sizes = [8, 16], strides = [1, 1]} : vector<8x32xf32> to vector<8x16xf32>
    %c0_12 = arith.constant 0 : index
    %c0_13 = arith.constant 0 : index
    %20 = vector.load %arg2[%c0_12, %c0_13] : memref<8x16xf32, #tpu.memory_space<vmem>>, vector<8x16xf32>
    %cst_14 = arith.constant 5.000000e-01 : f32
    %21 = vector.broadcast %cst_14 : f32 to vector<8x16xf32>
    %22 = arith.mulf %19, %21 : vector<8x16xf32>
    %23 = math.exp %22 : vector<8x16xf32>
    %24 = arith.mulf %20, %23 : vector<8x16xf32>
    %25 = arith.addf %18, %24 : vector<8x16xf32>
    %26 = arith.truncf %25 : vector<8x16xf32> to vector<8x16xbf16>
    %c0_15 = arith.constant 0 : index
    %c0_16 = arith.constant 0 : index
    %27 = vector.load %arg7[%c0_15, %c0_16] : memref<16x40xbf16, #tpu.memory_space<vmem>>, vector<16x40xbf16>
    %cst_17 = arith.constant dense<0.000000e+00> : vector<8x40xf32>
    %28 = tpu.matmul %26, %27, %cst_17 {dimension_numbers = #tpu.dot_dimension_numbers<[1], [0], [0], [1], [0, 0, 1, 1], [], []>} : vector<8x16xbf16>, vector<16x40xbf16>, vector<8x40xf32> -> vector<8x40xf32>
    %c0_18 = arith.constant 0 : index
    %c0_19 = arith.constant 0 : index
    %29 = vector.load %arg8[%c0_18, %c0_19] : memref<1x40xf32, #tpu.memory_space<vmem>>, vector<1x40xf32>
    %30 = vector.broadcast %29 : vector<1x40xf32> to vector<8x40xf32>
    %31 = arith.addf %28, %30 : vector<8x40xf32>
    %cst_20 = arith.constant 0.000000e+00 : f32
    %32 = vector.broadcast %cst_20 : f32 to vector<8x40xf32>
    %33 = arith.maximumf %31, %32 : vector<8x40xf32>
    %34 = arith.truncf %33 : vector<8x40xf32> to vector<8x40xbf16>
    %c0_21 = arith.constant 0 : index
    %c0_22 = arith.constant 0 : index
    %35 = vector.load %arg9[%c0_21, %c0_22] : memref<40x768xbf16, #tpu.memory_space<vmem>>, vector<40x768xbf16>
    %cst_23 = arith.constant dense<0.000000e+00> : vector<8x768xf32>
    %36 = tpu.matmul %34, %35, %cst_23 {dimension_numbers = #tpu.dot_dimension_numbers<[1], [0], [0], [1], [0, 0, 1, 1], [], []>} : vector<8x40xbf16>, vector<40x768xbf16>, vector<8x768xf32> -> vector<8x768xf32>
    %c0_24 = arith.constant 0 : index
    %c0_25 = arith.constant 0 : index
    %37 = vector.load %arg10[%c0_24, %c0_25] : memref<1x768xf32, #tpu.memory_space<vmem>>, vector<1x768xf32>
    %38 = vector.broadcast %37 : vector<1x768xf32> to vector<8x768xf32>
    %39 = arith.addf %36, %38 : vector<8x768xf32>
    %cst_26 = arith.constant 5.000000e-01 : f32
    %40 = vector.broadcast %cst_26 : f32 to vector<8x768xf32>
    %41 = arith.mulf %40, %39 : vector<8x768xf32>
    %42 = math.tanh %41 : vector<8x768xf32>
    %cst_27 = arith.constant 5.000000e-01 : f32
    %43 = vector.broadcast %cst_27 : f32 to vector<8x768xf32>
    %44 = arith.mulf %43, %42 : vector<8x768xf32>
    %cst_28 = arith.constant 5.000000e-01 : f32
    %45 = vector.broadcast %cst_28 : f32 to vector<8x768xf32>
    %46 = arith.addf %44, %45 : vector<8x768xf32>
    %47 = arith.truncf %46 : vector<8x768xf32> to vector<8x768xbf16>
    %c0_29 = arith.constant 0 : index
    %c0_30 = arith.constant 0 : index
    %48 = vector.load %arg11[%c0_29, %c0_30] : memref<8x768xbf16, #tpu.memory_space<vmem>>, vector<8x768xbf16>
    tpu.vector_store %arg11[%c0_29, %c0_30], %47 {strides = array<i32>} : memref<8x768xbf16, #tpu.memory_space<vmem>>, vector<8x768xbf16>,
    %c0_31 = arith.constant 0 : index
    %c0_32 = arith.constant 0 : index
    %49 = vector.load %arg12[%c0_31, %c0_32] : memref<8x32xf32, #tpu.memory_space<vmem>>, vector<8x32xf32>
    tpu.vector_store %arg12[%c0_31, %c0_32], %17 {strides = array<i32>} : memref<8x32xf32, #tpu.memory_space<vmem>>, vector<8x32xf32>,
    return
  }
  func.func @transform_0(%arg0: i32) -> (i32, i32) {
    %c0_i32 = arith.constant 0 : i32
    %c0_i32_0 = arith.constant 0 : i32
    return %arg0, %c0_i32 : i32, i32
  }
  func.func @transform_1(%arg0: i32) -> (i32, i32) {
    %c0_i32 = arith.constant 0 : i32
    %c0_i32_0 = arith.constant 0 : i32
    return %arg0, %c0_i32 : i32, i32
  }
  func.func @transform_2(%arg0: i32) -> (i32, i32) {
    %c0_i32 = arith.constant 0 : i32
    %c0_i32_0 = arith.constant 0 : i32
    %c0_i32_1 = arith.constant 0 : i32
    return %c0_i32, %c0_i32_0 : i32, i32
  }
  func.func @transform_3(%arg0: i32) -> (i32, i32) {
    %c0_i32 = arith.constant 0 : i32
    %c0_i32_0 = arith.constant 0 : i32
    %c0_i32_1 = arith.constant 0 : i32
    return %c0_i32, %c0_i32_0 : i32, i32
  }
  func.func @transform_4(%arg0: i32) -> (i32, i32) {
    %c0_i32 = arith.constant 0 : i32
    %c0_i32_0 = arith.constant 0 : i32
    %c0_i32_1 = arith.constant 0 : i32
    return %c0_i32, %c0_i32_0 : i32, i32
  }
  func.func @transform_5(%arg0: i32) -> (i32, i32) {
    %c0_i32 = arith.constant 0 : i32
    %c0_i32_0 = arith.constant 0 : i32
    %c0_i32_1 = arith.constant 0 : i32
    return %c0_i32, %c0_i32_0 : i32, i32
  }
  func.func @transform_6(%arg0: i32) -> (i32, i32) {
    %c0_i32 = arith.constant 0 : i32
    %c0_i32_0 = arith.constant 0 : i32
    %c0_i32_1 = arith.constant 0 : i32
    return %c0_i32, %c0_i32_0 : i32, i32
  }
  func.func @transform_7(%arg0: i32) -> (i32, i32) {
    %c0_i32 = arith.constant 0 : i32
    %c0_i32_0 = arith.constant 0 : i32
    %c0_i32_1 = arith.constant 0 : i32
    return %c0_i32, %c0_i32_0 : i32, i32
  }
  func.func @transform_8(%arg0: i32) -> (i32, i32) {
    %c0_i32 = arith.constant 0 : i32
    %c0_i32_0 = arith.constant 0 : i32
    %c0_i32_1 = arith.constant 0 : i32
    return %c0_i32, %c0_i32_0 : i32, i32
  }
  func.func @transform_9(%arg0: i32) -> (i32, i32) {
    %c0_i32 = arith.constant 0 : i32
    %c0_i32_0 = arith.constant 0 : i32
    %c0_i32_1 = arith.constant 0 : i32
    return %c0_i32, %c0_i32_0 : i32, i32
  }
  func.func @transform_10(%arg0: i32) -> (i32, i32) {
    %c0_i32 = arith.constant 0 : i32
    %c0_i32_0 = arith.constant 0 : i32
    return %arg0, %c0_i32 : i32, i32
  }
  func.func @transform_11(%arg0: i32) -> (i32, i32) {
    %c0_i32 = arith.constant 0 : i32
    %c0_i32_0 = arith.constant 0 : i32
    return %arg0, %c0_i32 : i32, i32
  }
}

</mosaic_0001>

<llo_original>
// kernel: tpu_custom_call.1
$region0: #{tpu_custom_call.1}
  #allocation0 [shape = 'u32[]', space=smem, size = 0x4, offset = 0x4, fixed_abs, tag = 'smem constant byte address 0x4 - core index']
  #allocation1 [shape = 'u32[144,128]{1,0:T(1,128)}', space=vmem, size = 0x12000, scoped, tag = 'internal scratch']
  %s0 = inlined_call_operand.vmem [shape: f32[8,700], index: 0, kind: input, shape index: {}]
  %s1 = inlined_call_operand.vmem [shape: f32[8,16], index: 1, kind: input, shape index: {}]
  %s2 = inlined_call_operand.vmem [shape: bf16[700,40], index: 2, kind: input, shape index: {}]
  %s3 = inlined_call_operand.vmem [shape: f32[1,40], index: 3, kind: input, shape index: {}]
  %s4 = inlined_call_operand.vmem [shape: bf16[40,32], index: 4, kind: input, shape index: {}]
  %s5 = inlined_call_operand.vmem [shape: f32[1,32], index: 5, kind: input, shape index: {}]
  %s6 = inlined_call_operand.vmem [shape: bf16[16,40], index: 6, kind: input, shape index: {}]
  %s7 = inlined_call_operand.vmem [shape: f32[1,40], index: 7, kind: input, shape index: {}]
  %s8 = inlined_call_operand.vmem [shape: bf16[40,768], index: 8, kind: input, shape index: {}]
  %s9 = inlined_call_operand.vmem [shape: f32[1,768], index: 9, kind: input, shape index: {}]
  %s10 = inlined_call_operand.hbm [shape: bf16[8,768], index: 10, kind: output, shape index: {0}]
  %s11 = inlined_call_operand.hbm [shape: f32[8,32], index: 11, kind: output, shape index: {1}]
  %12 = xla_tuple %s10, %s11
  %s13 = sld [smem:[#allocation0]]
  $region58: #{tpu_custom_call.1} parent=0
    _
  %s15 = ssub.s32 1, %s13
  %s16 = scalar_select 0, %s15, %s13
  $region1: #{tpu_custom_call.1} parent=0
    #allocation2 [shape = 'u8[12288]{0}', space=vmem, size = 0x3000, scoped, tag = 'output window, operand 0, single buffered']
    #allocation3 [shape = 's32[1]{0}', space=sflag, size = 0x4, scoped, tag = 'scoped memory for tpu_custom_call.1']
    #allocation4 [shape = 'u8[4096]{0}', space=vmem, size = 0x1000, scoped, tag = 'output window, operand 1, single buffered']
    #allocation5 [shape = 's32[1]{0}', space=sflag, size = 0x4, scoped, tag = 'scoped memory for tpu_custom_call.1']
    %17 = vsyncpa [#allocation3], 0
    %18 = vsyncpa [#allocation5], 0
    // Predicated region
    $region2: #{tpu_custom_call.1} parent=1 // pred_check
      _
    $region3: #{tpu_custom_call.1} parent=1 // pred_check_branch
      %20 = sbr.rel (0) target = $region5
    $region4: #{tpu_custom_call.1} parent=1 // pred_region
      _
    $region5: #{tpu_custom_call.1} parent=1 // pred_fallthru
      _
    // Predicated region
    $region6: #{tpu_custom_call.1} parent=1 // pred_check
      _
    $region7: #{tpu_custom_call.1} parent=1 // pred_check_branch
      %22 = sbr.rel (0) target = $region9
    $region8: #{tpu_custom_call.1} parent=1 // pred_region
      _
    $region9: #{tpu_custom_call.1} parent=1 // pred_fallthru
      _
    // Predicated region
    $region10: #{tpu_custom_call.1} parent=1 // pred_check
      _
    $region11: #{tpu_custom_call.1} parent=1 // pred_check_branch
      %24 = sbr.rel (0) target = $region13
    $region12: #{tpu_custom_call.1} parent=1 // pred_region
      _
    $region13: #{tpu_custom_call.1} parent=1 // pred_fallthru
      _
    // Predicated region
    $region14: #{tpu_custom_call.1} parent=1 // pred_check
      _
    $region15: #{tpu_custom_call.1} parent=1 // pred_check_branch
      %26 = sbr.rel (0) target = $region17
    $region16: #{tpu_custom_call.1} parent=1 // pred_region
      _
    $region17: #{tpu_custom_call.1} parent=1 // pred_fallthru
      _
    // Predicated region
    $region18: #{tpu_custom_call.1} parent=1 // pred_check
      _
    $region19: #{tpu_custom_call.1} parent=1 // pred_check_branch
      %28 = sbr.rel (0) target = $region21
    $region20: #{tpu_custom_call.1} parent=1 // pred_region
      _
    $region21: #{tpu_custom_call.1} parent=1 // pred_fallthru
      _
    // Predicated region
    $region22: #{tpu_custom_call.1} parent=1 // pred_check
      _
    $region23: #{tpu_custom_call.1} parent=1 // pred_check_branch
      %30 = sbr.rel (0) target = $region25
    $region24: #{tpu_custom_call.1} parent=1 // pred_region
      _
    $region25: #{tpu_custom_call.1} parent=1 // pred_fallthru
      _
    // Predicated region
    $region26: #{tpu_custom_call.1} parent=1 // pred_check
      _
    $region27: #{tpu_custom_call.1} parent=1 // pred_check_branch
      %32 = sbr.rel (0) target = $region29
    $region28: #{tpu_custom_call.1} parent=1 // pred_region
      _
    $region29: #{tpu_custom_call.1} parent=1 // pred_fallthru
      _
    // Predicated region
    $region30: #{tpu_custom_call.1} parent=1 // pred_check
      _
    $region31: #{tpu_custom_call.1} parent=1 // pred_check_branch
      %34 = sbr.rel (0) target = $region33
    $region32: #{tpu_custom_call.1} parent=1 // pred_region
      _
    $region33: #{tpu_custom_call.1} parent=1 // pred_fallthru
      _
    // Predicated region
    $region34: #{tpu_custom_call.1} parent=1 // pred_check
      _
    $region35: #{tpu_custom_call.1} parent=1 // pred_check_branch
      %36 = sbr.rel (0) target = $region37
    $region36: #{tpu_custom_call.1} parent=1 // pred_region
      _
    $region37: #{tpu_custom_call.1} parent=1 // pred_fallthru
      _
    // Predicated region
    $region38: #{tpu_custom_call.1} parent=1 // pred_check
      _
    $region39: #{tpu_custom_call.1} parent=1 // pred_check_branch
      %38 = sbr.rel (0) target = $region41
    $region40: #{tpu_custom_call.1} parent=1 // pred_region
      _
    $region41: #{tpu_custom_call.1} parent=1 // pred_fallthru
      _
    %v40 = vld [vmem:[%s0] sm:$0xff]
    %v41 = vld [vmem:[%s0 + $0x8] sm:$0xff]
    %v42 = vld [vmem:[%s0 + $0x10] sm:$0xff]
    %v43 = vld [vmem:[%s0 + $0x18] sm:$0xff]
    %v44 = vld [vmem:[%s0 + $0x20] sm:$0xff]
    %v45 = vld [vmem:[%s0 + $0x28] sm:$0xff]
    %v46 = vpack.c.bf16 %v40, %v40
    %v47 = vpack.c.bf16 %v41, %v41
    %v48 = vpack.c.bf16 %v42, %v42
    %v49 = vpack.c.bf16 %v43, %v43
    %v50 = vpack.c.bf16 %v44, %v44
    %v51 = vpack.c.bf16 %v45, %v45
    %v52 = vld [vmem:[%s2] sm:$0xf]
    %v53 = vld [vmem:[%s2 + $0x4] sm:$0xf]
    %v54 = vld [vmem:[%s2 + $0x8] sm:$0xf]
    %v55 = vld [vmem:[%s2 + $0xc] sm:$0xf]
    %v56 = vld [vmem:[%s2 + $0x10] sm:$0xf]
    %v57 = vld [vmem:[%s2 + $0x14] sm:$0xf]
    %v58 = vld [vmem:[%s2 + $0x18] sm:$0xf]
    %v59 = vld [vmem:[%s2 + $0x1c] sm:$0xf]
    %v60 = vld [vmem:[%s2 + $0x20] sm:$0xf]
    %v61 = vld [vmem:[%s2 + $0x24] sm:$0xf]
    %v62 = vld [vmem:[%s2 + $0x28] sm:$0xf]
    %v63 = vld [vmem:[%s2 + $0x2c] sm:$0xf]
    %v64 = vld [vmem:[%s2 + $0x30] sm:$0xf]
    %v65 = vld [vmem:[%s2 + $0x34] sm:$0xf]
    %v66 = vld [vmem:[%s2 + $0x38] sm:$0xf]
    %v67 = vld [vmem:[%s2 + $0x3c] sm:$0xf]
    %v68 = vld [vmem:[%s2 + $0x40] sm:$0xf]
    %v69 = vld [vmem:[%s2 + $0x44] sm:$0xf]
    %v70 = vld [vmem:[%s2 + $0x48] sm:$0xf]
    %v71 = vld [vmem:[%s2 + $0x4c] sm:$0xf]
    %v72 = vld [vmem:[%s2 + $0x50] sm:$0xf]
    %v73 = vld [vmem:[%s2 + $0x54] sm:$0xf]
    %v74 = vld [vmem:[%s2 + $0x58] sm:$0xf]
    %v75 = vld [vmem:[%s2 + $0x5c] sm:$0xf]
    %v76 = vld [vmem:[%s2 + $0x60] sm:$0xf]
    %v77 = vld [vmem:[%s2 + $0x64] sm:$0xf]
    %v78 = vld [vmem:[%s2 + $0x68] sm:$0xf]
    %v79 = vld [vmem:[%s2 + $0x6c] sm:$0xf]
    %v80 = vld [vmem:[%s2 + $0x70] sm:$0xf]
    %v81 = vld [vmem:[%s2 + $0x74] sm:$0xf]
    %v82 = vld [vmem:[%s2 + $0x78] sm:$0xf]
    %v83 = vld [vmem:[%s2 + $0x7c] sm:$0xf]
    %v84 = vld [vmem:[%s2 + $0x80] sm:$0xf]
    %v85 = vld [vmem:[%s2 + $0x84] sm:$0xf]
    %v86 = vld [vmem:[%s2 + $0x88] sm:$0xf]
    %v87 = vld [vmem:[%s2 + $0x8c] sm:$0xf]
    %v88 = vld [vmem:[%s2 + $0x90] sm:$0xf]
    %v89 = vld [vmem:[%s2 + $0x94] sm:$0xf]
    %v90 = vld [vmem:[%s2 + $0x98] sm:$0xf]
    %v91 = vld [vmem:[%s2 + $0x9c] sm:$0xf]
    %v92 = vld [vmem:[%s2 + $0xa0] sm:$0xf]
    %v93 = vld [vmem:[%s2 + $0xa4] sm:$0xf]
    %v94 = vld [vmem:[%s2 + $0xa8] sm:$0xf]
    %v95 = vld [vmem:[%s2 + $0xac] sm:$0xf]
    %v96 = vld [vmem:[%s2 + $0xb0] sm:$0xf]
    %v97 = vld [vmem:[%s2 + $0xb4] sm:$0xf]
    %v98 = vld [vmem:[%s2 + $0xb8] sm:$0xf]
    %v99 = vld [vmem:[%s2 + $0xbc] sm:$0xf]
    %v100 = vld [vmem:[%s2 + $0xc0] sm:$0xf]
    %v101 = vld [vmem:[%s2 + $0xc4] sm:$0xf]
    %v102 = vld [vmem:[%s2 + $0xc8] sm:$0xf]
    %v103 = vld [vmem:[%s2 + $0xcc] sm:$0xf]
    %v104 = vld [vmem:[%s2 + $0xd0] sm:$0xf]
    %v105 = vld [vmem:[%s2 + $0xd4] sm:$0xf]
    %v106 = vld [vmem:[%s2 + $0xd8] sm:$0xf]
    %v107 = vld [vmem:[%s2 + $0xdc] sm:$0xf]
    %v108 = vld [vmem:[%s2 + $0xe0] sm:$0xf]
    %v109 = vld [vmem:[%s2 + $0xe4] sm:$0xf]
    %v110 = vld [vmem:[%s2 + $0xe8] sm:$0xf]
    %v111 = vld [vmem:[%s2 + $0xec] sm:$0xf]
    %v112 = vld [vmem:[%s2 + $0xf0] sm:$0xf]
    %v113 = vld [vmem:[%s2 + $0xf4] sm:$0xf]
    %v114 = vld [vmem:[%s2 + $0xf8] sm:$0xf]
    %v115 = vld [vmem:[%s2 + $0xfc] sm:$0xf]
    %v116 = vld [vmem:[%s2 + $0x100] sm:$0xf]
    %v117 = vld [vmem:[%s2 + $0x104] sm:$0xf]
    %v118 = vld [vmem:[%s2 + $0x108] sm:$0xf]
    %v119 = vld [vmem:[%s2 + $0x10c] sm:$0xf]
    %v120 = vld [vmem:[%s2 + $0x110] sm:$0xf]
    %v121 = vld [vmem:[%s2 + $0x114] sm:$0xf]
    %v122 = vld [vmem:[%s2 + $0x118] sm:$0xf]
    %v123 = vld [vmem:[%s2 + $0x11c] sm:$0xf]
    %v124 = vld [vmem:[%s2 + $0x120] sm:$0xf]
    %v125 = vld [vmem:[%s2 + $0x124] sm:$0xf]
    %v126 = vld [vmem:[%s2 + $0x128] sm:$0xf]
    %v127 = vld [vmem:[%s2 + $0x12c] sm:$0xf]
    %v128 = vld [vmem:[%s2 + $0x130] sm:$0xf]
    %v129 = vld [vmem:[%s2 + $0x134] sm:$0xf]
    %v130 = vld [vmem:[%s2 + $0x138] sm:$0xf]
    %v131 = vld [vmem:[%s2 + $0x13c] sm:$0xf]
    %v132 = vld [vmem:[%s2 + $0x140] sm:$0xf]
    %v133 = vld [vmem:[%s2 + $0x144] sm:$0xf]
    %v134 = vld [vmem:[%s2 + $0x148] sm:$0xf]
    %v135 = vld [vmem:[%s2 + $0x14c] sm:$0xf]
    %v136 = vld [vmem:[%s2 + $0x150] sm:$0xf]
    %v137 = vld [vmem:[%s2 + $0x154] sm:$0xf]
    %v138 = vld [vmem:[%s2 + $0x158] sm:$0xf]
    %v139 = vld [vmem:[%s2 + $0x15c] sm:$0x3]
    %v140 = vld [vmem:[%s3] sm:$0x1]
    %v142 = vlaneseq
    %v143 = vshrl.u32 %v142, 7
    %v144 = vsub.s32 0, %v143
    %v145 = vrot.slane %v140, %v144
    %v235 = vunpack.c.l.b16 %v52
    %v236 = vunpack.c.l.b16 %v53
    %v237 = vunpack.c.l.b16 %v54
    %v238 = vunpack.c.l.b16 %v55
    %v239 = vunpack.c.l.b16 %v56
    %v240 = vunpack.c.l.b16 %v57
    %v241 = vunpack.c.l.b16 %v58
    %v242 = vunpack.c.l.b16 %v59
    %v243 = vunpack.c.l.b16 %v60
    %v244 = vunpack.c.l.b16 %v61
    %v245 = vunpack.c.l.b16 %v62
    %v246 = vunpack.c.l.b16 %v63
    %v247 = vunpack.c.l.b16 %v64
    %v248 = vunpack.c.l.b16 %v65
    %v249 = vunpack.c.l.b16 %v66
    %v250 = vunpack.c.l.b16 %v67
    %v251 = vunpack.c.l.b16 %v68
    %v252 = vunpack.c.l.b16 %v69
    %v253 = vunpack.c.l.b16 %v70
    %v254 = vunpack.c.l.b16 %v71
    %v255 = vunpack.c.l.b16 %v72
    %v256 = vunpack.c.l.b16 %v73
    %v257 = vunpack.c.l.b16 %v74
    %v258 = vunpack.c.l.b16 %v75
    %v259 = vunpack.c.l.b16 %v76
    %v260 = vunpack.c.l.b16 %v77
    %v261 = vunpack.c.l.b16 %v78
    %v262 = vunpack.c.l.b16 %v79
    %v263 = vunpack.c.l.b16 %v80
    %v264 = vunpack.c.l.b16 %v81
    %v265 = vunpack.c.l.b16 %v82
    %v266 = vunpack.c.l.b16 %v83
    %v267 = vunpack.c.l.b16 %v84
    %v268 = vunpack.c.l.b16 %v85
    %v269 = vunpack.c.l.b16 %v86
    %v270 = vunpack.c.l.b16 %v87
    %v271 = vunpack.c.l.b16 %v88
    %v272 = vunpack.c.l.b16 %v89
    %v273 = vunpack.c.l.b16 %v90
    %v274 = vunpack.c.l.b16 %v91
    %v275 = vunpack.c.l.b16 %v92
    %v276 = vunpack.c.l.b16 %v93
    %v277 = vunpack.c.l.b16 %v94
    %v278 = vunpack.c.l.b16 %v95
    %v279 = vunpack.c.l.b16 %v96
    %v280 = vunpack.c.l.b16 %v97
    %v281 = vunpack.c.l.b16 %v98
    %v282 = vunpack.c.l.b16 %v99
    %v283 = vunpack.c.l.b16 %v100
    %v284 = vunpack.c.l.b16 %v101
    %v285 = vunpack.c.l.b16 %v102
    %v286 = vunpack.c.l.b16 %v103
    %v287 = vunpack.c.l.b16 %v104
    %v288 = vunpack.c.l.b16 %v105
    %v289 = vunpack.c.l.b16 %v106
    %v290 = vunpack.c.l.b16 %v107
    %v291 = vunpack.c.l.b16 %v108
    %v292 = vunpack.c.l.b16 %v109
    %v293 = vunpack.c.l.b16 %v110
    %v294 = vunpack.c.l.b16 %v111
    %v295 = vunpack.c.l.b16 %v112
    %v296 = vunpack.c.l.b16 %v113
    %v297 = vunpack.c.l.b16 %v114
    %v298 = vunpack.c.l.b16 %v115
    %v299 = vunpack.c.l.b16 %v116
    %v300 = vunpack.c.l.b16 %v117
    %v301 = vunpack.c.l.b16 %v118
    %v302 = vunpack.c.l.b16 %v119
    %v303 = vunpack.c.l.b16 %v120
    %v304 = vunpack.c.l.b16 %v121
    %v305 = vunpack.c.l.b16 %v122
    %v306 = vunpack.c.l.b16 %v123
    %v307 = vunpack.c.l.b16 %v124
    %v308 = vunpack.c.l.b16 %v125
    %v309 = vunpack.c.l.b16 %v126
    %v310 = vunpack.c.l.b16 %v127
    %v311 = vunpack.c.l.b16 %v128
    %v312 = vunpack.c.l.b16 %v129
    %v313 = vunpack.c.l.b16 %v130
    %v314 = vunpack.c.l.b16 %v131
    %v315 = vunpack.c.l.b16 %v132
    %v316 = vunpack.c.l.b16 %v133
    %v317 = vunpack.c.l.b16 %v134
    %v318 = vunpack.c.l.b16 %v135
    %v319 = vunpack.c.l.b16 %v136
    %v320 = vunpack.c.l.b16 %v137
    %v321 = vunpack.c.l.b16 %v138
    %v322 = vunpack.c.l.b16 %v139
    %v323 = vpack.c.b16 %v236, %v235
    %v324 = vpack.c.b16 %v238, %v237
    %v325 = vpack.c.b16 %v240, %v239
    %v326 = vpack.c.b16 %v242, %v241
    %v327 = vpack.c.b16 %v244, %v243
    %v328 = vpack.c.b16 %v246, %v245
    %v329 = vpack.c.b16 %v248, %v247
    %v330 = vpack.c.b16 %v250, %v249
    %v331 = vpack.c.b16 %v252, %v251
    %v332 = vpack.c.b16 %v254, %v253
    %v333 = vpack.c.b16 %v256, %v255
    %v334 = vpack.c.b16 %v258, %v257
    %v335 = vpack.c.b16 %v260, %v259
    %v336 = vpack.c.b16 %v262, %v261
    %v337 = vpack.c.b16 %v264, %v263
    %v338 = vpack.c.b16 %v266, %v265
    %v339 = vpack.c.b16 %v268, %v267
    %v340 = vpack.c.b16 %v270, %v269
    %v341 = vpack.c.b16 %v272, %v271
    %v342 = vpack.c.b16 %v274, %v273
    %v343 = vpack.c.b16 %v276, %v275
    %v344 = vpack.c.b16 %v278, %v277
    %v345 = vpack.c.b16 %v280, %v279
    %v346 = vpack.c.b16 %v282, %v281
    %v347 = vpack.c.b16 %v284, %v283
    %v348 = vpack.c.b16 %v286, %v285
    %v349 = vpack.c.b16 %v288, %v287
    %v350 = vpack.c.b16 %v290, %v289
    %v351 = vpack.c.b16 %v292, %v291
    %v352 = vpack.c.b16 %v294, %v293
    %v353 = vpack.c.b16 %v296, %v295
    %v354 = vpack.c.b16 %v298, %v297
    %v355 = vpack.c.b16 %v300, %v299
    %v356 = vpack.c.b16 %v302, %v301
    %v357 = vpack.c.b16 %v304, %v303
    %v358 = vpack.c.b16 %v306, %v305
    %v359 = vpack.c.b16 %v308, %v307
    %v360 = vpack.c.b16 %v310, %v309
    %v361 = vpack.c.b16 %v312, %v311
    %v362 = vpack.c.b16 %v314, %v313
    %v363 = vpack.c.b16 %v316, %v315
    %v364 = vpack.c.b16 %v318, %v317
    %v365 = vpack.c.b16 %v320, %v319
    %v366 = vpack.c.b16 %v322, %v321
    %vm410 = vcmask 490496
    %v412 = vsel %vm410, %v51, 0
    %vm414 = vcmask 1045504
    %v416 = vsel %vm414, %v366, 0
    %418 = vmatprep.subr.bf16.mxu0 0
    %419 = vmatpush1.bf16.msra.mxu0 %v330
    %420 = vmatprep.subr.bf16.mxu0 0
    %421 = vmatpush1.bf16.msra.mxu0 %v329
    %422 = vmatprep.subr.bf16.mxu0 0
    %423 = vmatpush1.bf16.msra.mxu0 %v328
    %424 = vmatprep.subr.bf16.mxu0 0
    %425 = vmatpush1.bf16.msra.mxu0 %v327
    %426 = vmatprep.subr.bf16.mxu0 0
    %427 = vmatpush1.bf16.msra.mxu0 %v326
    %428 = vmatprep.subr.bf16.mxu0 0
    %429 = vmatpush1.bf16.msra.mxu0 %v325
    %430 = vmatprep.subr.bf16.mxu0 0
    %431 = vmatpush1.bf16.msra.mxu0 %v324
    %432 = vmatprep.subr.bf16.mxu0 0
    %433 = vmatpush1.bf16.msra.mxu0 %v323
    %434 = vmatprep.subr.bf16.mxu0 0
    %435 = vmatpush2.bf16.msra.mxu0 %v338
    %436 = vmatprep.subr.bf16.mxu0 0
    %437 = vmatpush2.bf16.msra.mxu0 %v337
    %438 = vmatprep.subr.bf16.mxu0 0
    %439 = vmatpush2.bf16.msra.mxu0 %v336
    %440 = vmatprep.subr.bf16.mxu0 0
    %441 = vmatpush2.bf16.msra.mxu0 %v335
    %442 = vmatprep.subr.bf16.mxu0 0
    %443 = vmatpush2.bf16.msra.mxu0 %v334
    %444 = vmatprep.subr.bf16.mxu0 0
    %445 = vmatpush2.bf16.msra.mxu0 %v333
    %446 = vmatprep.subr.bf16.mxu0 0
    %447 = vmatpush2.bf16.msra.mxu0 %v332
    %448 = vmatprep.subr.bf16.mxu0 0
    %449 = vmatpush2.bf16.msra.mxu0 %v331
    %450 = vmatprep.mubr.bf16.mxu0 %v47
    %451 = vmatmul.mubr.bf16.gmra.mxu0 %v46
    %v452 = vpop.f32.mrf.mxu0
    %v453 = vadd.f32 %v145, %v452
    %v454 = vpop.f32.mrf.mxu0
    %v455 = vpop.f32.mrf.mxu0
    %v456 = vpop.f32.mrf.mxu0
    %457 = vdwg.mxu0
    %458 = vmatprep.subr.bf16.mxu0 0
    %459 = vmatpush1.bf16.msra.mxu0 %v346
    %460 = vmatprep.subr.bf16.mxu0 0
    %461 = vmatpush1.bf16.msra.mxu0 %v345
    %462 = vmatprep.subr.bf16.mxu0 0
    %463 = vmatpush1.bf16.msra.mxu0 %v344
    %464 = vmatprep.subr.bf16.mxu0 0
    %465 = vmatpush1.bf16.msra.mxu0 %v343
    %466 = vmatprep.subr.bf16.mxu0 0
    %467 = vmatpush1.bf16.msra.mxu0 %v342
    %468 = vmatprep.subr.bf16.mxu0 0
    %469 = vmatpush1.bf16.msra.mxu0 %v341
    %470 = vmatprep.subr.bf16.mxu0 0
    %471 = vmatpush1.bf16.msra.mxu0 %v340
    %472 = vmatprep.subr.bf16.mxu0 0
    %473 = vmatpush1.bf16.msra.mxu0 %v339
    %474 = vmatprep.subr.bf16.mxu0 0
    %475 = vmatpush2.bf16.msra.mxu0 %v354
    %476 = vmatprep.subr.bf16.mxu0 0
    %477 = vmatpush2.bf16.msra.mxu0 %v353
    %478 = vmatprep.subr.bf16.mxu0 0
    %479 = vmatpush2.bf16.msra.mxu0 %v352
    %480 = vmatprep.subr.bf16.mxu0 0
    %481 = vmatpush2.bf16.msra.mxu0 %v351
    %482 = vmatprep.subr.bf16.mxu0 0
    %483 = vmatpush2.bf16.msra.mxu0 %v350
    %484 = vmatprep.subr.bf16.mxu0 0
    %485 = vmatpush2.bf16.msra.mxu0 %v349
    %486 = vmatprep.subr.bf16.mxu0 0
    %487 = vmatpush2.bf16.msra.mxu0 %v348
    %488 = vmatprep.subr.bf16.mxu0 0
    %489 = vmatpush2.bf16.msra.mxu0 %v347
    %490 = vmatprep.mubr.bf16.mxu0 %v49
    %491 = vmatmul.mubr.bf16.gmra.mxu0 %v48
    %v492 = vpop.f32.mrf.mxu0
    %v493 = vadd.f32 %v453, %v492
    %v494 = vpop.f32.mrf.mxu0
    %v495 = vpop.f32.mrf.mxu0
    %v496 = vpop.f32.mrf.mxu0
    %497 = vdwg.mxu0
    %498 = vmatprep.subr.bf16.mxu0 0
    %499 = vmatpush1.bf16.msra.mxu0 %v362
    %500 = vmatprep.subr.bf16.mxu0 0
    %501 = vmatpush1.bf16.msra.mxu0 %v361
    %502 = vmatprep.subr.bf16.mxu0 0
    %503 = vmatpush1.bf16.msra.mxu0 %v360
    %504 = vmatprep.subr.bf16.mxu0 0
    %505 = vmatpush1.bf16.msra.mxu0 %v359
    %506 = vmatprep.subr.bf16.mxu0 0
    %507 = vmatpush1.bf16.msra.mxu0 %v358
    %508 = vmatprep.subr.bf16.mxu0 0
    %509 = vmatpush1.bf16.msra.mxu0 %v357
    %510 = vmatprep.subr.bf16.mxu0 0
    %511 = vmatpush1.bf16.msra.mxu0 %v356
    %512 = vmatprep.subr.bf16.mxu0 0
    %513 = vmatpush1.bf16.msra.mxu0 %v355
    %514 = vmatprep.subr.bf16.mxu0 0
    %515 = vmatpush2.bf16.msra.mxu0 0
    %516 = vmatprep.subr.bf16.mxu0 0
    %517 = vmatpush2.bf16.msra.mxu0 0
    %518 = vmatprep.subr.bf16.mxu0 0
    %519 = vmatpush2.bf16.msra.mxu0 0
    %520 = vmatprep.subr.bf16.mxu0 0
    %521 = vmatpush2.bf16.msra.mxu0 0
    %522 = vmatprep.subr.bf16.mxu0 0
    %523 = vmatpush2.bf16.msra.mxu0 %v416
    %524 = vmatprep.subr.bf16.mxu0 0
    %525 = vmatpush2.bf16.msra.mxu0 %v365
    %526 = vmatprep.subr.bf16.mxu0 0
    %527 = vmatpush2.bf16.msra.mxu0 %v364
    %528 = vmatprep.subr.bf16.mxu0 0
    %529 = vmatpush2.bf16.msra.mxu0 %v363
    %530 = vmatprep.mubr.bf16.mxu0 %v412
    %531 = vmatmul.mubr.bf16.gmra.mxu0 %v50
    %v532 = vpop.f32.mrf.mxu0
    %v533 = vadd.f32 %v493, %v532
    %v534 = vpop.f32.mrf.mxu0
    %v535 = vpop.f32.mrf.mxu0
    %v536 = vpop.f32.mrf.mxu0
    %537 = vdwg.mxu0
    %vm538 = vcmp.ge.f32.partialorder %v533, 0.0
    %v539 = vmul.f32 %v533, 0.2
    %v540 = vsel %vm538, %v533, %v539
    %v541 = vpack.c.bf16 %v540, %v540
    %v542 = vld [vmem:[%s4] sm:$0xf]
    %v543 = vld [vmem:[%s4 + $0x4] sm:$0xf]
    %v544 = vld [vmem:[%s4 + $0x8] sm:$0xf]
    %v545 = vld [vmem:[%s4 + $0xc] sm:$0xf]
    %v546 = vld [vmem:[%s4 + $0x10] sm:$0xf]
    %v547 = vld [vmem:[%s5] sm:$0x1]
    %v549 = vlaneseq
    %v550 = vshrl.u32 %v549, 7
    %v551 = vsub.s32 0, %v550
    %v552 = vrot.slane %v547, %v551
    %v559 = vunpack.c.l.b16 %v542
    %v560 = vunpack.c.l.b16 %v543
    %v561 = vunpack.c.l.b16 %v544
    %v562 = vunpack.c.l.b16 %v545
    %v563 = vunpack.c.l.b16 %v546
    %v564 = vpack.c.b16 %v560, %v559
    %v565 = vpack.c.b16 %v562, %v561
    %v566 = vpack.c.b16 %v563, %v563
    %vm569 = vcmask 326656
    %v571 = vsel %vm569, %v541, 0
    %vm573 = vcmask 1043456
    %v575 = vsel %vm573, %v566, 0
    %577 = vmatprep.subr.bf16.mxu0 0
    %578 = vmatpush1.bf16.msra.mxu0 0
    %579 = vmatprep.subr.bf16.mxu0 0
    %580 = vmatpush1.bf16.msra.mxu0 0
    %581 = vmatprep.subr.bf16.mxu0 0
    %582 = vmatpush1.bf16.msra.mxu0 0
    %583 = vmatprep.subr.bf16.mxu0 0
    %584 = vmatpush1.bf16.msra.mxu0 0
    %585 = vmatprep.subr.bf16.mxu0 0
    %586 = vmatpush1.bf16.msra.mxu0 0
    %587 = vmatprep.subr.bf16.mxu0 0
    %588 = vmatpush1.bf16.msra.mxu0 %v575
    %589 = vmatprep.subr.bf16.mxu0 0
    %590 = vmatpush1.bf16.msra.mxu0 %v565
    %591 = vmatprep.subr.bf16.mxu0 0
    %592 = vmatpush1.bf16.msra.mxu0 %v564
    %593 = vmatprep.subr.bf16.mxu0 0
    %594 = vmatpush2.bf16.msra.mxu0 0
    %595 = vmatprep.subr.bf16.mxu0 0
    %596 = vmatpush2.bf16.msra.mxu0 0
    %597 = vmatprep.subr.bf16.mxu0 0
    %598 = vmatpush2.bf16.msra.mxu0 0
    %599 = vmatprep.subr.bf16.mxu0 0
    %600 = vmatpush2.bf16.msra.mxu0 0
    %601 = vmatprep.subr.bf16.mxu0 0
    %602 = vmatpush2.bf16.msra.mxu0 0
    %603 = vmatprep.subr.bf16.mxu0 0
    %604 = vmatpush2.bf16.msra.mxu0 0
    %605 = vmatprep.subr.bf16.mxu0 0
    %606 = vmatpush2.bf16.msra.mxu0 0
    %607 = vmatprep.subr.bf16.mxu0 0
    %608 = vmatpush2.bf16.msra.mxu0 0
    %609 = vmatprep.mubr.bf16.mxu0 0
    %610 = vmatmul.mubr.bf16.gmra.mxu0 %v571
    %v611 = vpop.f32.mrf.mxu0
    %v612 = vadd.f32 %v552, %v611
    %v613 = vpop.f32.mrf.mxu0
    %v614 = vpop.f32.mrf.mxu0
    %v615 = vpop.f32.mrf.mxu0
    %616 = vdwg.mxu0
    %v617 = vld [vmem:[%s1] sm:$0xff]
    %v618 = vmul.f32 %v612, 0.5
    %v619 = vmul.f32 %v618, 1.442695
    %v620 = vpow.pop %v619
    %622 = vrot.lane.b32.xlu0 %v620, 112
    %v623 = vpop.permute.xlu0 %622
    %v625 = vmul.f32 %v617, %v623
    %v626 = vadd.f32 %v612, %v625
    %v627 = vpack.c.bf16 %v626, %v626
    %v628 = vld [vmem:[%s6] sm:$0xf]
    %v629 = vld [vmem:[%s6 + $0x4] sm:$0xf]
    %v630 = vld [vmem:[%s7] sm:$0x1]
    %v632 = vlaneseq
    %v633 = vshrl.u32 %v632, 7
    %v634 = vsub.s32 0, %v633
    %v635 = vrot.slane %v630, %v634
    %v639 = vunpack.c.l.b16 %v628
    %v640 = vunpack.c.l.b16 %v629
    %v641 = vpack.c.b16 %v640, %v639
    %vm643 = vcmask 130048
    %v645 = vsel %vm643, %v627, 0
    %647 = vmatprep.subr.bf16.mxu0 0
    %648 = vmatpush1.bf16.msra.mxu0 0
    %649 = vmatprep.subr.bf16.mxu0 0
    %650 = vmatpush1.bf16.msra.mxu0 0
    %651 = vmatprep.subr.bf16.mxu0 0
    %652 = vmatpush1.bf16.msra.mxu0 0
    %653 = vmatprep.subr.bf16.mxu0 0
    %654 = vmatpush1.bf16.msra.mxu0 0
    %655 = vmatprep.subr.bf16.mxu0 0
    %656 = vmatpush1.bf16.msra.mxu0 0
    %657 = vmatprep.subr.bf16.mxu0 0
    %658 = vmatpush1.bf16.msra.mxu0 0
    %659 = vmatprep.subr.bf16.mxu0 0
    %660 = vmatpush1.bf16.msra.mxu0 0
    %661 = vmatprep.subr.bf16.mxu0 0
    %662 = vmatpush1.bf16.msra.mxu0 %v641
    %663 = vmatprep.subr.bf16.mxu0 0
    %664 = vmatpush2.bf16.msra.mxu0 0
    %665 = vmatprep.subr.bf16.mxu0 0
    %666 = vmatpush2.bf16.msra.mxu0 0
    %667 = vmatprep.subr.bf16.mxu0 0
    %668 = vmatpush2.bf16.msra.mxu0 0
    %669 = vmatprep.subr.bf16.mxu0 0
    %670 = vmatpush2.bf16.msra.mxu0 0
    %671 = vmatprep.subr.bf16.mxu0 0
    %672 = vmatpush2.bf16.msra.mxu0 0
    %673 = vmatprep.subr.bf16.mxu0 0
    %674 = vmatpush2.bf16.msra.mxu0 0
    %675 = vmatprep.subr.bf16.mxu0 0
    %676 = vmatpush2.bf16.msra.mxu0 0
    %677 = vmatprep.subr.bf16.mxu0 0
    %678 = vmatpush2.bf16.msra.mxu0 0
    %679 = vmatprep.mubr.bf16.mxu0 0
    %680 = vmatmul.mubr.bf16.gmra.mxu0 %v645
    %v681 = vpop.f32.mrf.mxu0
    %v682 = vadd.f32 %v635, %v681
    %v683 = vpop.f32.mrf.mxu0
    %v684 = vpop.f32.mrf.mxu0
    %v685 = vpop.f32.mrf.mxu0
    %686 = vdwg.mxu0
    %v687 = vmax.f32 %v682, 0.0
    %v688 = vpack.c.bf16 %v687, %v687
    %v689 = vld [vmem:[%s8] sm:$0xff]
    %v690 = vld [vmem:[%s8 + $0x8] sm:$0xff]
    %v691 = vld [vmem:[%s8 + $0x10] sm:$0xff]
    %v692 = vld [vmem:[%s8 + $0x18] sm:$0xff]
    %v693 = vld [vmem:[%s8 + $0x20] sm:$0xff]
    %v694 = vld [vmem:[%s8 + $0x28] sm:$0xff]
    %v695 = vld [vmem:[%s8 + $0x30] sm:$0xff]
    %v696 = vld [vmem:[%s8 + $0x38] sm:$0xff]
    %v697 = vld [vmem:[%s8 + $0x40] sm:$0xff]
    %v698 = vld [vmem:[%s8 + $0x48] sm:$0xff]
    %v699 = vld [vmem:[%s8 + $0x50] sm:$0xff]
    %v700 = vld [vmem:[%s8 + $0x58] sm:$0xff]
    %v701 = vld [vmem:[%s8 + $0x60] sm:$0xff]
    %v702 = vld [vmem:[%s8 + $0x68] sm:$0xff]
    %v703 = vld [vmem:[%s8 + $0x70] sm:$0xff]
    %v704 = vld [vmem:[%s9] sm:$0x3f]
    %v706 = vlaneseq
    %v707 = vshrl.u32 %v706, 7
    %v708 = vsub.s32 0, %v707
    %v709 = vrot.slane %v704, %v708
    %v710 = vlaneseq
    %v711 = vshrl.u32 %v710, 7
    %v712 = vsub.s32 1, %v711
    %v713 = vrot.slane %v704, %v712
    %v714 = vlaneseq
    %v715 = vshrl.u32 %v714, 7
    %v716 = vsub.s32 2, %v715
    %v717 = vrot.slane %v704, %v716
    %v718 = vlaneseq
    %v719 = vshrl.u32 %v718, 7
    %v720 = vsub.s32 3, %v719
    %v721 = vrot.slane %v704, %v720
    %v722 = vlaneseq
    %v723 = vshrl.u32 %v722, 7
    %v724 = vsub.s32 4, %v723
    %v725 = vrot.slane %v704, %v724
    %v726 = vlaneseq
    %v727 = vshrl.u32 %v726, 7
    %v728 = vsub.s32 5, %v727
    %v729 = vrot.slane %v704, %v728
    %v751 = vunpack.c.l.b16 %v689
    %v752 = vunpack.c.h.b16 %v689
    %v753 = vunpack.c.l.b16 %v690
    %v754 = vunpack.c.h.b16 %v690
    %v755 = vunpack.c.l.b16 %v691
    %v756 = vunpack.c.h.b16 %v691
    %v757 = vunpack.c.l.b16 %v692
    %v758 = vunpack.c.h.b16 %v692
    %v759 = vunpack.c.l.b16 %v693
    %v760 = vunpack.c.h.b16 %v693
    %v761 = vunpack.c.l.b16 %v694
    %v762 = vunpack.c.h.b16 %v694
    %v763 = vunpack.c.l.b16 %v695
    %v764 = vunpack.c.h.b16 %v695
    %v765 = vunpack.c.l.b16 %v696
    %v766 = vunpack.c.h.b16 %v696
    %v767 = vunpack.c.l.b16 %v697
    %v768 = vunpack.c.h.b16 %v697
    %v769 = vunpack.c.l.b16 %v698
    %v770 = vunpack.c.h.b16 %v698
    %v771 = vunpack.c.l.b16 %v699
    %v772 = vunpack.c.h.b16 %v699
    %v773 = vunpack.c.l.b16 %v700
    %v774 = vunpack.c.h.b16 %v700
    %v775 = vunpack.c.l.b16 %v701
    %v776 = vunpack.c.h.b16 %v701
    %v777 = vunpack.c.l.b16 %v702
    %v778 = vunpack.c.h.b16 %v702
    %v779 = vunpack.c.l.b16 %v703
    %v780 = vunpack.c.h.b16 %v703
    %v781 = vpack.c.b16 %v757, %v751
    %v782 = vpack.c.b16 %v758, %v752
    %v783 = vpack.c.b16 %v759, %v753
    %v784 = vpack.c.b16 %v760, %v754
    %v785 = vpack.c.b16 %v761, %v755
    %v786 = vpack.c.b16 %v762, %v756
    %v787 = vpack.c.b16 %v769, %v763
    %v788 = vpack.c.b16 %v770, %v764
    %v789 = vpack.c.b16 %v771, %v765
    %v790 = vpack.c.b16 %v772, %v766
    %v791 = vpack.c.b16 %v773, %v767
    %v792 = vpack.c.b16 %v774, %v768
    %v793 = vpack.c.b16 %v775, %v775
    %v794 = vpack.c.b16 %v776, %v776
    %v795 = vpack.c.b16 %v777, %v777
    %v796 = vpack.c.b16 %v778, %v778
    %v797 = vpack.c.b16 %v779, %v779
    %v798 = vpack.c.b16 %v780, %v780
    %v812 = vsel %vm569, %v688, 0
    %v815 = vsel %vm573, %v793, 0
    %v818 = vsel %vm573, %v794, 0
    %v821 = vsel %vm573, %v795, 0
    %v824 = vsel %vm573, %v796, 0
    %v827 = vsel %vm573, %v797, 0
    %v830 = vsel %vm573, %v798, 0
    %832 = vmatprep.subr.bf16.mxu0 0
    %833 = vmatpush1.bf16.msra.mxu0 0
    %834 = vmatprep.subr.bf16.mxu0 0
    %835 = vmatpush1.bf16.msra.mxu0 0
    %836 = vmatprep.subr.bf16.mxu0 0
    %837 = vmatpush1.bf16.msra.mxu0 0
    %838 = vmatprep.subr.bf16.mxu0 0
    %839 = vmatpush1.bf16.msra.mxu0 0
    %840 = vmatprep.subr.bf16.mxu0 0
    %841 = vmatpush1.bf16.msra.mxu0 0
    %842 = vmatprep.subr.bf16.mxu0 %v818
    %843 = vmatpush1.bf16.msra.mxu0 %v815
    %844 = vmatprep.subr.bf16.mxu0 %v788
    %845 = vmatpush1.bf16.msra.mxu0 %v787
    %846 = vmatprep.subr.bf16.mxu0 %v782
    %847 = vmatpush1.bf16.msra.mxu0 %v781
    %848 = vmatprep.subr.bf16.mxu0 0
    %849 = vmatpush2.bf16.msra.mxu0 0
    %850 = vmatprep.subr.bf16.mxu0 0
    %851 = vmatpush2.bf16.msra.mxu0 0
    %852 = vmatprep.subr.bf16.mxu0 0
    %853 = vmatpush2.bf16.msra.mxu0 0
    %854 = vmatprep.subr.bf16.mxu0 0
    %855 = vmatpush2.bf16.msra.mxu0 0
    %856 = vmatprep.subr.bf16.mxu0 0
    %857 = vmatpush2.bf16.msra.mxu0 0
    %858 = vmatprep.subr.bf16.mxu0 0
    %859 = vmatpush2.bf16.msra.mxu0 0
    %860 = vmatprep.subr.bf16.mxu0 0
    %861 = vmatpush2.bf16.msra.mxu0 0
    %862 = vmatprep.subr.bf16.mxu0 0
    %863 = vmatpush2.bf16.msra.mxu0 0
    %864 = vmatprep.mubr.bf16.mxu0 0
    %865 = vmatmul.mubr.bf16.gmra.mxu0 %v812
    %v866 = vpop.f32.mrf.mxu0
    %v867 = vadd.f32 %v709, %v866
    %v868 = vpop.f32.mrf.mxu0
    %v869 = vadd.f32 %v713, %v868
    %v870 = vpop.f32.mrf.mxu0
    %v871 = vpop.f32.mrf.mxu0
    %872 = vdwg.mxu0
    %873 = vmatprep.subr.bf16.mxu0 0
    %874 = vmatpush1.bf16.msra.mxu0 0
    %875 = vmatprep.subr.bf16.mxu0 0
    %876 = vmatpush1.bf16.msra.mxu0 0
    %877 = vmatprep.subr.bf16.mxu0 0
    %878 = vmatpush1.bf16.msra.mxu0 0
    %879 = vmatprep.subr.bf16.mxu0 0
    %880 = vmatpush1.bf16.msra.mxu0 0
    %881 = vmatprep.subr.bf16.mxu0 0
    %882 = vmatpush1.bf16.msra.mxu0 0
    %883 = vmatprep.subr.bf16.mxu0 %v824
    %884 = vmatpush1.bf16.msra.mxu0 %v821
    %885 = vmatprep.subr.bf16.mxu0 %v790
    %886 = vmatpush1.bf16.msra.mxu0 %v789
    %887 = vmatprep.subr.bf16.mxu0 %v784
    %888 = vmatpush1.bf16.msra.mxu0 %v783
    %889 = vmatprep.subr.bf16.mxu0 0
    %890 = vmatpush2.bf16.msra.mxu0 0
    %891 = vmatprep.subr.bf16.mxu0 0
    %892 = vmatpush2.bf16.msra.mxu0 0
    %893 = vmatprep.subr.bf16.mxu0 0
    %894 = vmatpush2.bf16.msra.mxu0 0
    %895 = vmatprep.subr.bf16.mxu0 0
    %896 = vmatpush2.bf16.msra.mxu0 0
    %897 = vmatprep.subr.bf16.mxu0 0
    %898 = vmatpush2.bf16.msra.mxu0 0
    %899 = vmatprep.subr.bf16.mxu0 0
    %900 = vmatpush2.bf16.msra.mxu0 0
    %901 = vmatprep.subr.bf16.mxu0 0
    %902 = vmatpush2.bf16.msra.mxu0 0
    %903 = vmatprep.subr.bf16.mxu0 0
    %904 = vmatpush2.bf16.msra.mxu0 0
    %905 = vmatprep.mubr.bf16.mxu0 0
    %906 = vmatmul.mubr.bf16.gmra.mxu0 %v812
    %v907 = vpop.f32.mrf.mxu0
    %v908 = vadd.f32 %v717, %v907
    %v909 = vpop.f32.mrf.mxu0
    %v910 = vadd.f32 %v721, %v909
    %v911 = vpop.f32.mrf.mxu0
    %v912 = vpop.f32.mrf.mxu0
    %913 = vdwg.mxu0
    %914 = vmatprep.subr.bf16.mxu0 0
    %915 = vmatpush1.bf16.msra.mxu0 0
    %916 = vmatprep.subr.bf16.mxu0 0
    %917 = vmatpush1.bf16.msra.mxu0 0
    %918 = vmatprep.subr.bf16.mxu0 0
    %919 = vmatpush1.bf16.msra.mxu0 0
    %920 = vmatprep.subr.bf16.mxu0 0
    %921 = vmatpush1.bf16.msra.mxu0 0
    %922 = vmatprep.subr.bf16.mxu0 0
    %923 = vmatpush1.bf16.msra.mxu0 0
    %924 = vmatprep.subr.bf16.mxu0 %v830
    %925 = vmatpush1.bf16.msra.mxu0 %v827
    %926 = vmatprep.subr.bf16.mxu0 %v792
    %927 = vmatpush1.bf16.msra.mxu0 %v791
    %928 = vmatprep.subr.bf16.mxu0 %v786
    %929 = vmatpush1.bf16.msra.mxu0 %v785
    %930 = vmatprep.subr.bf16.mxu0 0
    %931 = vmatpush2.bf16.msra.mxu0 0
    %932 = vmatprep.subr.bf16.mxu0 0
    %933 = vmatpush2.bf16.msra.mxu0 0
    %934 = vmatprep.subr.bf16.mxu0 0
    %935 = vmatpush2.bf16.msra.mxu0 0
    %936 = vmatprep.subr.bf16.mxu0 0
    %937 = vmatpush2.bf16.msra.mxu0 0
    %938 = vmatprep.subr.bf16.mxu0 0
    %939 = vmatpush2.bf16.msra.mxu0 0
    %940 = vmatprep.subr.bf16.mxu0 0
    %941 = vmatpush2.bf16.msra.mxu0 0
    %942 = vmatprep.subr.bf16.mxu0 0
    %943 = vmatpush2.bf16.msra.mxu0 0
    %944 = vmatprep.subr.bf16.mxu0 0
    %945 = vmatpush2.bf16.msra.mxu0 0
    %946 = vmatprep.mubr.bf16.mxu0 0
    %947 = vmatmul.mubr.bf16.gmra.mxu0 %v812
    %v948 = vpop.f32.mrf.mxu0
    %v949 = vadd.f32 %v725, %v948
    %v950 = vpop.f32.mrf.mxu0
    %v951 = vadd.f32 %v729, %v950
    %v952 = vpop.f32.mrf.mxu0
    %v953 = vpop.f32.mrf.mxu0
    %954 = vdwg.mxu0
    %v955 = vmul.f32 %v867, 0.5
    %v956 = vmul.f32 %v869, 0.5
    %v957 = vmul.f32 %v908, 0.5
    %v958 = vmul.f32 %v910, 0.5
    %v959 = vmul.f32 %v949, 0.5
    %v960 = vmul.f32 %v951, 0.5
    %v961 = vtanh.pop %v955
    %v962 = vtanh.pop %v956
    %v963 = vtanh.pop %v957
    %v964 = vtanh.pop %v958
    %v965 = vtanh.pop %v959
    %v966 = vtanh.pop %v960
    %v967 = vmul.f32 %v961, 0.5
    %v968 = vmul.f32 %v962, 0.5
    %v969 = vmul.f32 %v963, 0.5
    %v970 = vmul.f32 %v964, 0.5
    %v971 = vmul.f32 %v965, 0.5
    %v972 = vmul.f32 %v966, 0.5
    %v973 = vadd.f32 %v967, 0.5
    %v974 = vadd.f32 %v968, 0.5
    %v975 = vadd.f32 %v969, 0.5
    %v976 = vadd.f32 %v970, 0.5
    %v977 = vadd.f32 %v971, 0.5
    %v978 = vadd.f32 %v972, 0.5
    %v979 = vpack.c.bf16 %v973, %v973
    %v980 = vpack.c.bf16 %v974, %v974
    %v981 = vpack.c.bf16 %v975, %v975
    %v982 = vpack.c.bf16 %v976, %v976
    %v983 = vpack.c.bf16 %v977, %v977
    %v984 = vpack.c.bf16 %v978, %v978
    %v991 = vunpack.c.l.b16 %v979
    %v992 = vunpack.c.l.b16 %v980
    %v993 = vunpack.c.l.b16 %v981
    %v994 = vunpack.c.l.b16 %v982
    %v995 = vunpack.c.l.b16 %v983
    %v996 = vunpack.c.l.b16 %v984
    %v997 = vpack.c.b16 %v992, %v991
    %v998 = vpack.c.b16 %v994, %v993
    %v999 = vpack.c.b16 %v996, %v995
    %1003 = vst [vmem:[#allocation2] sm:$0xff] %v997
    %1004 = vst [vmem:[#allocation2 + $0x8] sm:$0xff] %v998
    %1005 = vst [vmem:[#allocation2 + $0x10] sm:$0xff] %v999
    %vm1006 = vcmask 261120
    %1007 = vst.msk [vmem:[#allocation4] sm:$0xff] %vm1006, %v612
    // Predicated region
    $region42: #{tpu_custom_call.1} parent=1 // pred_check
      _
    $region43: #{tpu_custom_call.1} parent=1 // pred_check_branch
      %1009 = sbr.rel (0) target = $region45
    $region44: #{tpu_custom_call.1} parent=1 // pred_region
      %s1011 = ssub.s32 384, 384
      %1012 = vsyncadd [#allocation3], %s1011
      %s1014 = sshll.u32 [#allocation2], 4
      %s1015 = int_to_ptr.vmem [resolvable:$true] %s1014
      %1017 = dma.vmem_to_hbm [thread:$0]  %s1015, 384, %s10, [#allocation3]
    $region45: #{tpu_custom_call.1} parent=1 // pred_fallthru
      _
    // Predicated region
    $region46: #{tpu_custom_call.1} parent=1 // pred_check
      _
    $region47: #{tpu_custom_call.1} parent=1 // pred_check_branch
      %1019 = sbr.rel (0) target = $region49
    $region48: #{tpu_custom_call.1} parent=1 // pred_region
      %s1021 = ssub.s32 128, 128
      %1022 = vsyncadd [#allocation5], %s1021
      %s1024 = sshll.u32 [#allocation4], 4
      %s1025 = int_to_ptr.vmem [resolvable:$true] %s1024
      %1027 = dma.vmem_to_hbm [thread:$0]  %s1025, 128, %s11, [#allocation5]
    $region49: #{tpu_custom_call.1} parent=1 // pred_fallthru
      _
    // Predicated region
    $region50: #{tpu_custom_call.1} parent=1 // pred_check
      _
    $region51: #{tpu_custom_call.1} parent=1 // pred_check_branch
      %1029 = sbr.rel (0) target = $region53
    $region52: #{tpu_custom_call.1} parent=1 // pred_region
      %1030 = dma.done [#allocation3], 384
    $region53: #{tpu_custom_call.1} parent=1 // pred_fallthru
      _
    // Predicated region
    $region54: #{tpu_custom_call.1} parent=1 // pred_check
      _
    $region55: #{tpu_custom_call.1} parent=1 // pred_check_branch
      %1032 = sbr.rel (0) target = $region57
    $region56: #{tpu_custom_call.1} parent=1 // pred_region
      %1033 = dma.done [#allocation5], 128
    $region57: #{tpu_custom_call.1} parent=1 // pred_fallthru
      _
    %1034 = vsyncpa [#allocation3], 1
    %1035 = vsyncpa [#allocation5], 1

</llo_original>
